<compile_context>
chip_gen: v5e
topology: v5e:2x2
jax: 0.10.0
libtpu: 0.0.40
codegen_flags: <defaults>
</compile_context>

<pallas_src>
import jax
import jax.numpy as jnp
from jax.experimental import pallas as pl
from jax.experimental.pallas import tpu as pltpu

BN_EPS = 1e-5
LANES = 128


def _round_up(x, m):
    return ((x + m - 1) // m) * m


def _sublane(dtype):
    # sublane tile of the (sublane, lane) layout: 8 for 4-byte, 16 for 2-byte,
    # 32 for 1-byte dtypes.
    return max(8, 32 // jnp.dtype(dtype).itemsize)


# ---------------------------------------------------------------------------
# Kernel: 4 back-to-back matmuls with bias + relu, f32 accumulation on the MXU.
# ---------------------------------------------------------------------------
def wind_kernel(x_ref,
                w1_ref, b1_ref,
                w2_ref, b2_ref,
                fc1w_ref, fc1b_ref,
                fc2w_ref, fc2b_ref,
                out_ref):
    # conv1 (center tap) + BN1 folded -> dot + bias + relu
    h = jnp.dot(x_ref[...], w1_ref[...], preferred_element_type=jnp.float32)
    h = jnp.maximum(h + b1_ref[...], 0.0)

    # conv2 (center tap) + BN2 folded
    h = jnp.dot(h.astype(w2_ref.dtype), w2_ref[...],
                preferred_element_type=jnp.float32)
    h = jnp.maximum(h + b2_ref[...], 0.0)

    # flatten is a no-op at L=1; fc1 + relu
    h = jnp.dot(h.astype(fc1w_ref.dtype), fc1w_ref[...],
                preferred_element_type=jnp.float32)
    h = jnp.maximum(h + fc1b_ref[...], 0.0)

    # fc2 (output columns zero-padded to a multiple of 128 lanes)
    out = jnp.dot(h.astype(fc2w_ref.dtype), fc2w_ref[...],
                  preferred_element_type=jnp.float32)
    out_ref[...] = (out + fc2b_ref[...]).astype(out_ref.dtype)


# ---------------------------------------------------------------------------
# Wrapper
# ---------------------------------------------------------------------------
def wind_model_forward(x_ncl, fp, *, block_b=1024, out_dtype=None,
                       return_padded=False, min_grid_steps=2):
    """x_ncl: (B, Cin, 1) float32, NCL layout like the PyTorch module.
    fp: folded params from fold_params().
    out_dtype defaults to the compute dtype (bf16 output on bf16 deployments).
    return_padded=True returns the lane-dense (Bp, 128k) buffer (no re-slice)."""
    B, Cin, L = x_ncl.shape
    assert L == 1, "fc1 = Linear(128*1, 256) forces sequence length 1"
    num_classes = fp["num_classes"]
    n_out_pad = fp["fc2_w"].shape[1]
    compute_dtype = fp["w1"].dtype
    out_dtype = compute_dtype if out_dtype is None else jnp.dtype(out_dtype)

    # Sublane tile: satisfy both the input (compute dtype) and output dtype.
    sub = max(_sublane(compute_dtype), _sublane(out_dtype))

    x2d = x_ncl[:, :, 0].astype(compute_dtype)     # (B, Cin), channels on lanes

    # --- batch tiling -------------------------------------------------------
    Bp = _round_up(B, sub)
    BB = min(_round_up(block_b, sub), Bp)
    # Guarantee >= 2 grid steps when the batch allows it: "parallel" grid axes
    # shard across v7x's two TensorCores and enable x/out DMA pipelining.
    if (Bp // BB) < min_grid_steps and Bp >= min_grid_steps * sub:
        BB = _round_up((Bp + min_grid_steps - 1) // min_grid_steps, sub)
    Bp = _round_up(B, BB)
    if Bp != B:
        x2d = jnp.pad(x2d, ((0, Bp - B), (0, 0)))
    grid = (Bp // BB,)

    weight_arrays = [
        fp["w1"], fp["b1"],
        fp["w2"], fp["b2"],
        fp["fc1_w"], fp["fc1_b"],
        fp["fc2_w"], fp["fc2_b"],
    ]

    # --- scoped-VMEM estimate (only raise the limit if we actually need it) --
    itemsize_c = jnp.dtype(compute_dtype).itemsize
    itemsize_o = jnp.dtype(out_dtype).itemsize
    weight_bytes = sum(int(a.size) * a.dtype.itemsize for a in weight_arrays)
    vmem_est = (2 * BB * Cin * itemsize_c            # double-buffered x tile
                + 2 * BB * n_out_pad * itemsize_o    # double-buffered out tile
                + 2 * weight_bytes                   # weights (worst case 2x)
                + 4 * BB * (64 + 128 + 256) * 4)     # f32 intermediates + slack
    cp_kwargs = dict(dimension_semantics=("parallel",))
    if vmem_est > 12 * 1024 * 1024:                  # v5e scoped default is 16 MiB
        cp_kwargs["vmem_limit_bytes"] = int(min(2 * vmem_est, 64 * 1024 * 1024))

    def build_call(single_buffer_weights):
        wkw = {"pipeline_mode": pl.Buffered(1)} if single_buffer_weights else {}

        def const_spec(shape):
            nd = len(shape)
            return pl.BlockSpec(shape, lambda i, _nd=nd: (0,) * _nd, **wkw)

        in_specs = [pl.BlockSpec((BB, Cin), lambda i: (i, 0))] + \
                   [const_spec(a.shape) for a in weight_arrays]

        return pl.pallas_call(
            wind_kernel,
            out_shape=jax.ShapeDtypeStruct((Bp, n_out_pad), out_dtype),
            grid=grid,
            in_specs=in_specs,
            out_specs=pl.BlockSpec((BB, n_out_pad), lambda i: (i, 0)),
            compiler_params=pltpu.CompilerParams(**cp_kwargs),
        )

    try:
        # Weights never change across grid steps -> single-buffer them.
        out = build_call(True)(x2d, *weight_arrays)
    except Exception:
        # Fallback for jax versions without BlockSpec(pipeline_mode=...):
        # default double-buffered weights, identical results.
        out = build_call(False)(x2d, *weight_arrays)

    if return_padded:
        return out                       # (Bp, n_out_pad) lane-dense buffer
    return out[:B, :num_classes]


# ---------------------------------------------------------------------------
# Parameter handling
# ---------------------------------------------------------------------------
def init_torch_like_params(key, input_size, num_classes):
    """Parameters in PyTorch layout (conv: (out,in,k), fc: (out,in)); BN uses
    fresh-init eval-mode running stats (mean=0, var=1, gamma=1, beta=0)."""
    ks = jax.random.split(key, 8)
    scale = 0.05
    return {
        "conv1_w": scale * jax.random.normal(ks[0], (64, input_size, 3), jnp.float32),
        "conv1_b": scale * jax.random.normal(ks[1], (64,), jnp.float32),
        "bn1_g": jnp.ones((64,), jnp.float32),
        "bn1_b": jnp.zeros((64,), jnp.float32),
        "bn1_m": jnp.zeros((64,), jnp.float32),
        "bn1_v": jnp.ones((64,), jnp.float32),
        "conv2_w": scale * jax.random.normal(ks[2], (128, 64, 3), jnp.float32),
        "conv2_b": scale * jax.random.normal(ks[3], (128,), jnp.float32),
        "bn2_g": jnp.ones((128,), jnp.float32),
        "bn2_b": jnp.zeros((128,), jnp.float32),
        "bn2_m": jnp.zeros((128,), jnp.float32),
        "bn2_v": jnp.ones((128,), jnp.float32),
        "fc1_w": scale * jax.random.normal(ks[4], (256, 128), jnp.float32),
        "fc1_b": scale * jax.random.normal(ks[5], (256,), jnp.float32),
        "fc2_w": scale * jax.random.normal(ks[6], (num_classes, 256), jnp.float32),
        "fc2_b": scale * jax.random.normal(ks[7], (num_classes,), jnp.float32),
    }


def fold_params(raw, *, compute_dtype=jnp.float32):
    """Fold eval-mode BN + conv bias into effective weights/biases, pre-slice
    the center conv tap, transpose fc weights, and lane-pad fc2 to 128 cols.
    compute_dtype=jnp.bfloat16 is the deployment path (half the weight /
    activation / output bytes, ~2-4x MXU rate); accumulation stays f32."""
    s1 = raw["bn1_g"] / jnp.sqrt(raw["bn1_v"] + BN_EPS)            # (64,)
    w1_eff = raw["conv1_w"][:, :, 1].T * s1[None, :]               # (Cin, 64)
    b1_eff = (raw["conv1_b"] - raw["bn1_m"]) * s1 + raw["bn1_b"]   # (64,)

    s2 = raw["bn2_g"] / jnp.sqrt(raw["bn2_v"] + BN_EPS)            # (128,)
    w2_eff = raw["conv2_w"][:, :, 1].T * s2[None, :]               # (64, 128)
    b2_eff = (raw["conv2_b"] - raw["bn2_m"]) * s2 + raw["bn2_b"]   # (128,)

    fc1_w = raw["fc1_w"].T                                         # (128, 256)
    fc1_b = raw["fc1_b"]

    num_classes = raw["fc2_w"].shape[0]
    nc_pad = _round_up(num_classes, LANES)
    fc2_w = jnp.zeros((raw["fc2_w"].shape[1], nc_pad), jnp.float32)
    fc2_w = fc2_w.at[:, :num_classes].set(raw["fc2_w"].T)          # (256, nc_pad)
    fc2_b = jnp.zeros((nc_pad,), jnp.float32).at[:num_classes].set(raw["fc2_b"])

    return {
        "w1": w1_eff.astype(compute_dtype),
        "b1": b1_eff[None, :].astype(jnp.float32),
        "w2": w2_eff.astype(compute_dtype),
        "b2": b2_eff[None, :].astype(jnp.float32),
        "fc1_w": fc1_w.astype(compute_dtype),
        "fc1_b": fc1_b[None, :].astype(jnp.float32),
        "fc2_w": fc2_w.astype(compute_dtype),
        "fc2_b": fc2_b[None, :].astype(jnp.float32),
        "num_classes": num_classes,
    }


def reference_forward(x_ncl, raw):
    """Pure-JAX reference of the eval-mode PyTorch forward (unfolded params)."""
    x = x_ncl[:, :, 0]
    h = x @ raw["conv1_w"][:, :, 1].T + raw["conv1_b"]
    h = (h - raw["bn1_m"]) * (raw["bn1_g"] / jnp.sqrt(raw["bn1_v"] + BN_EPS)) + raw["bn1_b"]
    h = jnp.maximum(h, 0.0)
    h = h @ raw["conv2_w"][:, :, 1].T + raw["conv2_b"]
    h = (h - raw["bn2_m"]) * (raw["bn2_g"] / jnp.sqrt(raw["bn2_v"] + BN_EPS)) + raw["bn2_b"]
    h = jnp.maximum(h, 0.0)
    h = jnp.maximum(h @ raw["fc1_w"].T + raw["fc1_b"], 0.0)
    return h @ raw["fc2_w"].T + raw["fc2_b"]


if __name__ == "__main__":
    INPUT_SIZE, NUM_CLASSES = 16, 10

    key = jax.random.PRNGKey(0)
    kx, kp, kx2 = jax.random.split(key, 3)
    raw = init_torch_like_params(kp, INPUT_SIZE, NUM_CLASSES)

    # --- correctness path: f32 compute, tiny batch (single grid step) -------
    B = 8
    x = jax.random.normal(kx, (B, INPUT_SIZE, 1), jnp.float32)       # NCL, L=1
    folded_f32 = fold_params(raw, compute_dtype=jnp.float32)
    out = wind_model_forward(x, folded_f32, out_dtype=jnp.float32)
    out = jax.block_until_ready(out)
    ref = reference_forward(x, raw)
    assert out.shape == (B, NUM_CLASSES)
    assert jnp.allclose(out, ref, atol=1e-4, rtol=1e-4), \
        float(jnp.max(jnp.abs(out - ref)))

    # --- deployment path: bf16 weights/activations/output, padded + tiled
    #     batch, >=2 grid steps (exercises v7x megacore + pipelining) ---------
    B2 = 300
    x2 = jax.random.normal(kx2, (B2, INPUT_SIZE, 1), jnp.float32)
    folded_bf16 = fold_params(raw, compute_dtype=jnp.bfloat16)
    out2 = wind_model_forward(x2, folded_bf16)                        # bf16 out
    out2 = jax.block_until_ready(out2)
    ref2 = reference_forward(x2, raw)
    assert out2.shape == (B2, NUM_CLASSES)
    err = float(jnp.max(jnp.abs(out2.astype(jnp.float32) - ref2)))
    # bf16 inputs/weights/output with f32 accumulation: loose tolerance.
    assert err < 0.08, err

    print("KERNEL_OK")
</pallas_src>

<mosaic_0001>
module attributes {stable_mosaic.version = 11 : i64} {
  func.func @wind_kernel(%arg0: i32, %arg1: memref<8x16xf32, #tpu.memory_space<vmem>>, %arg2: memref<16x64xf32, #tpu.memory_space<vmem>>, %arg3: memref<1x64xf32, #tpu.memory_space<vmem>>, %arg4: memref<64x128xf32, #tpu.memory_space<vmem>>, %arg5: memref<1x128xf32, #tpu.memory_space<vmem>>, %arg6: memref<128x256xf32, #tpu.memory_space<vmem>>, %arg7: memref<1x256xf32, #tpu.memory_space<vmem>>, %arg8: memref<256x128xf32, #tpu.memory_space<vmem>>, %arg9: memref<1x128xf32, #tpu.memory_space<vmem>>, %arg10: memref<8x128xf32, #tpu.memory_space<vmem>>) attributes {dimension_semantics = [#tpu.dimension_semantics<parallel>], iteration_bounds = array<i64: 1>, scalar_prefetch = 0 : i64, scratch_operands = 0 : i64, tpu.core_type = #tpu.core_type<tc>, window_params = [{transform_indices = @transform_0, window_bounds = array<i64: 8, 16>}, {pipeline_mode = #tpu.pipeline_mode<synchronous>, transform_indices = @transform_1, window_bounds = array<i64: 16, 64>}, {pipeline_mode = #tpu.pipeline_mode<synchronous>, transform_indices = @transform_2, window_bounds = array<i64: 1, 64>}, {pipeline_mode = #tpu.pipeline_mode<synchronous>, transform_indices = @transform_3, window_bounds = array<i64: 64, 128>}, {pipeline_mode = #tpu.pipeline_mode<synchronous>, transform_indices = @transform_4, window_bounds = array<i64: 1, 128>}, {pipeline_mode = #tpu.pipeline_mode<synchronous>, transform_indices = @transform_5, window_bounds = array<i64: 128, 256>}, {pipeline_mode = #tpu.pipeline_mode<synchronous>, transform_indices = @transform_6, window_bounds = array<i64: 1, 256>}, {pipeline_mode = #tpu.pipeline_mode<synchronous>, transform_indices = @transform_7, window_bounds = array<i64: 256, 128>}, {pipeline_mode = #tpu.pipeline_mode<synchronous>, transform_indices = @transform_8, window_bounds = array<i64: 1, 128>}, {transform_indices = @transform_9, window_bounds = array<i64: 8, 128>}]} {
    %c0 = arith.constant 0 : index
    %c0_0 = arith.constant 0 : index
    %0 = vector.load %arg1[%c0, %c0_0] : memref<8x16xf32, #tpu.memory_space<vmem>>, vector<8x16xf32>
    %c0_1 = arith.constant 0 : index
    %c0_2 = arith.constant 0 : index
    %1 = vector.load %arg2[%c0_1, %c0_2] : memref<16x64xf32, #tpu.memory_space<vmem>>, vector<16x64xf32>
    %cst = arith.constant dense<0.000000e+00> : vector<8x64xf32>
    %2 = tpu.matmul %0, %1, %cst {dimension_numbers = #tpu.dot_dimension_numbers<[1], [0], [0], [1], [0, 0, 1, 1], [], []>} : vector<8x16xf32>, vector<16x64xf32>, vector<8x64xf32> -> vector<8x64xf32>
    %c0_3 = arith.constant 0 : index
    %c0_4 = arith.constant 0 : index
    %3 = vector.load %arg3[%c0_3, %c0_4] : memref<1x64xf32, #tpu.memory_space<vmem>>, vector<1x64xf32>
    %4 = vector.broadcast %3 : vector<1x64xf32> to vector<8x64xf32>
    %5 = arith.addf %2, %4 : vector<8x64xf32>
    %cst_5 = arith.constant 0.000000e+00 : f32
    %6 = vector.broadcast %cst_5 : f32 to vector<8x64xf32>
    %7 = arith.maximumf %5, %6 : vector<8x64xf32>
    %c0_6 = arith.constant 0 : index
    %c0_7 = arith.constant 0 : index
    %8 = vector.load %arg4[%c0_6, %c0_7] : memref<64x128xf32, #tpu.memory_space<vmem>>, vector<64x128xf32>
    %cst_8 = arith.constant dense<0.000000e+00> : vector<8x128xf32>
    %9 = tpu.matmul %7, %8, %cst_8 {dimension_numbers = #tpu.dot_dimension_numbers<[1], [0], [0], [1], [0, 0, 1, 1], [], []>} : vector<8x64xf32>, vector<64x128xf32>, vector<8x128xf32> -> vector<8x128xf32>
    %c0_9 = arith.constant 0 : index
    %c0_10 = arith.constant 0 : index
    %10 = vector.load %arg5[%c0_9, %c0_10] : memref<1x128xf32, #tpu.memory_space<vmem>>, vector<1x128xf32>
    %11 = vector.broadcast %10 : vector<1x128xf32> to vector<8x128xf32>
    %12 = arith.addf %9, %11 : vector<8x128xf32>
    %cst_11 = arith.constant 0.000000e+00 : f32
    %13 = vector.broadcast %cst_11 : f32 to vector<8x128xf32>
    %14 = arith.maximumf %12, %13 : vector<8x128xf32>
    %c0_12 = arith.constant 0 : index
    %c0_13 = arith.constant 0 : index
    %15 = vector.load %arg6[%c0_12, %c0_13] : memref<128x256xf32, #tpu.memory_space<vmem>>, vector<128x256xf32>
    %cst_14 = arith.constant dense<0.000000e+00> : vector<8x256xf32>
    %16 = tpu.matmul %14, %15, %cst_14 {dimension_numbers = #tpu.dot_dimension_numbers<[1], [0], [0], [1], [0, 0, 1, 1], [], []>} : vector<8x128xf32>, vector<128x256xf32>, vector<8x256xf32> -> vector<8x256xf32>
    %c0_15 = arith.constant 0 : index
    %c0_16 = arith.constant 0 : index
    %17 = vector.load %arg7[%c0_15, %c0_16] : memref<1x256xf32, #tpu.memory_space<vmem>>, vector<1x256xf32>
    %18 = vector.broadcast %17 : vector<1x256xf32> to vector<8x256xf32>
    %19 = arith.addf %16, %18 : vector<8x256xf32>
    %cst_17 = arith.constant 0.000000e+00 : f32
    %20 = vector.broadcast %cst_17 : f32 to vector<8x256xf32>
    %21 = arith.maximumf %19, %20 : vector<8x256xf32>
    %c0_18 = arith.constant 0 : index
    %c0_19 = arith.constant 0 : index
    %22 = vector.load %arg8[%c0_18, %c0_19] : memref<256x128xf32, #tpu.memory_space<vmem>>, vector<256x128xf32>
    %cst_20 = arith.constant dense<0.000000e+00> : vector<8x128xf32>
    %23 = tpu.matmul %21, %22, %cst_20 {dimension_numbers = #tpu.dot_dimension_numbers<[1], [0], [0], [1], [0, 0, 1, 1], [], []>} : vector<8x256xf32>, vector<256x128xf32>, vector<8x128xf32> -> vector<8x128xf32>
    %c0_21 = arith.constant 0 : index
    %c0_22 = arith.constant 0 : index
    %24 = vector.load %arg9[%c0_21, %c0_22] : memref<1x128xf32, #tpu.memory_space<vmem>>, vector<1x128xf32>
    %25 = vector.broadcast %24 : vector<1x128xf32> to vector<8x128xf32>
    %26 = arith.addf %23, %25 : vector<8x128xf32>
    %c0_23 = arith.constant 0 : index
    %c0_24 = arith.constant 0 : index
    %27 = vector.load %arg10[%c0_23, %c0_24] : memref<8x128xf32, #tpu.memory_space<vmem>>, vector<8x128xf32>
    tpu.vector_store %arg10[%c0_23, %c0_24], %26 {strides = array<i32>} : memref<8x128xf32, #tpu.memory_space<vmem>>, vector<8x128xf32>,
    return
  }
  func.func @transform_0(%arg0: i32) -> (i32, i32) {
    %c0_i32 = arith.constant 0 : i32
    %c0_i32_0 = arith.constant 0 : i32
    return %arg0, %c0_i32 : i32, i32
  }
  func.func @transform_1(%arg0: i32) -> (i32, i32) {
    %c0_i32 = arith.constant 0 : i32
    %c0_i32_0 = arith.constant 0 : i32
    %c0_i32_1 = arith.constant 0 : i32
    return %c0_i32, %c0_i32_0 : i32, i32
  }
  func.func @transform_2(%arg0: i32) -> (i32, i32) {
    %c0_i32 = arith.constant 0 : i32
    %c0_i32_0 = arith.constant 0 : i32
    %c0_i32_1 = arith.constant 0 : i32
    return %c0_i32, %c0_i32_0 : i32, i32
  }
  func.func @transform_3(%arg0: i32) -> (i32, i32) {
    %c0_i32 = arith.constant 0 : i32
    %c0_i32_0 = arith.constant 0 : i32
    %c0_i32_1 = arith.constant 0 : i32
    return %c0_i32, %c0_i32_0 : i32, i32
  }
  func.func @transform_4(%arg0: i32) -> (i32, i32) {
    %c0_i32 = arith.constant 0 : i32
    %c0_i32_0 = arith.constant 0 : i32
    %c0_i32_1 = arith.constant 0 : i32
    return %c0_i32, %c0_i32_0 : i32, i32
  }
  func.func @transform_5(%arg0: i32) -> (i32, i32) {
    %c0_i32 = arith.constant 0 : i32
    %c0_i32_0 = arith.constant 0 : i32
    %c0_i32_1 = arith.constant 0 : i32
    return %c0_i32, %c0_i32_0 : i32, i32
  }
  func.func @transform_6(%arg0: i32) -> (i32, i32) {
    %c0_i32 = arith.constant 0 : i32
    %c0_i32_0 = arith.constant 0 : i32
    %c0_i32_1 = arith.constant 0 : i32
    return %c0_i32, %c0_i32_0 : i32, i32
  }
  func.func @transform_7(%arg0: i32) -> (i32, i32) {
    %c0_i32 = arith.constant 0 : i32
    %c0_i32_0 = arith.constant 0 : i32
    %c0_i32_1 = arith.constant 0 : i32
    return %c0_i32, %c0_i32_0 : i32, i32
  }
  func.func @transform_8(%arg0: i32) -> (i32, i32) {
    %c0_i32 = arith.constant 0 : i32
    %c0_i32_0 = arith.constant 0 : i32
    %c0_i32_1 = arith.constant 0 : i32
    return %c0_i32, %c0_i32_0 : i32, i32
  }
  func.func @transform_9(%arg0: i32) -> (i32, i32) {
    %c0_i32 = arith.constant 0 : i32
    %c0_i32_0 = arith.constant 0 : i32
    return %arg0, %c0_i32 : i32, i32
  }
}

module attributes {stable_mosaic.version = 11 : i64} {
  func.func @wind_kernel(%arg0: i32, %arg1: memref<8x16xf32, #tpu.memory_space<vmem>>, %arg2: memref<16x64xf32, #tpu.memory_space<vmem>>, %arg3: memref<1x64xf32, #tpu.memory_space<vmem>>, %arg4: memref<64x128xf32, #tpu.memory_space<vmem>>, %arg5: memref<1x128xf32, #tpu.memory_space<vmem>>, %arg6: memref<128x256xf32, #tpu.memory_space<vmem>>, %arg7: memref<1x256xf32, #tpu.memory_space<vmem>>, %arg8: memref<256x128xf32, #tpu.memory_space<vmem>>, %arg9: memref<1x128xf32, #tpu.memory_space<vmem>>, %arg10: memref<8x128xf32, #tpu.memory_space<vmem>>) attributes {dimension_semantics = [#tpu.dimension_semantics<parallel>], iteration_bounds = array<i64: 1>, scalar_prefetch = 0 : i64, scratch_operands = 0 : i64, tpu.core_type = #tpu.core_type<tc>, window_params = [{transform_indices = @transform_0, window_bounds = array<i64: 8, 16>}, {pipeline_mode = #tpu.pipeline_mode<synchronous>, transform_indices = @transform_1, window_bounds = array<i64: 16, 64>}, {pipeline_mode = #tpu.pipeline_mode<synchronous>, transform_indices = @transform_2, window_bounds = array<i64: 1, 64>}, {pipeline_mode = #tpu.pipeline_mode<synchronous>, transform_indices = @transform_3, window_bounds = array<i64: 64, 128>}, {pipeline_mode = #tpu.pipeline_mode<synchronous>, transform_indices = @transform_4, window_bounds = array<i64: 1, 128>}, {pipeline_mode = #tpu.pipeline_mode<synchronous>, transform_indices = @transform_5, window_bounds = array<i64: 128, 256>}, {pipeline_mode = #tpu.pipeline_mode<synchronous>, transform_indices = @transform_6, window_bounds = array<i64: 1, 256>}, {pipeline_mode = #tpu.pipeline_mode<synchronous>, transform_indices = @transform_7, window_bounds = array<i64: 256, 128>}, {pipeline_mode = #tpu.pipeline_mode<synchronous>, transform_indices = @transform_8, window_bounds = array<i64: 1, 128>}, {transform_indices = @transform_9, window_bounds = array<i64: 8, 128>}]} {
    %c0 = arith.constant 0 : index
    %c0_0 = arith.constant 0 : index
    %0 = vector.load %arg1[%c0, %c0_0] : memref<8x16xf32, #tpu.memory_space<vmem>>, vector<8x16xf32>
    %c0_1 = arith.constant 0 : index
    %c0_2 = arith.constant 0 : index
    %1 = vector.load %arg2[%c0_1, %c0_2] : memref<16x64xf32, #tpu.memory_space<vmem>>, vector<16x64xf32>
    %cst = arith.constant dense<0.000000e+00> : vector<8x64xf32>
    %2 = tpu.matmul %0, %1, %cst {dimension_numbers = #tpu.dot_dimension_numbers<[1], [0], [0], [1], [0, 0, 1, 1], [], []>} : vector<8x16xf32>, vector<16x64xf32>, vector<8x64xf32> -> vector<8x64xf32>
    %c0_3 = arith.constant 0 : index
    %c0_4 = arith.constant 0 : index
    %3 = vector.load %arg3[%c0_3, %c0_4] : memref<1x64xf32, #tpu.memory_space<vmem>>, vector<1x64xf32>
    %4 = vector.broadcast %3 : vector<1x64xf32> to vector<8x64xf32>
    %5 = arith.addf %2, %4 : vector<8x64xf32>
    %cst_5 = arith.constant 0.000000e+00 : f32
    %6 = vector.broadcast %cst_5 : f32 to vector<8x64xf32>
    %7 = arith.maximumf %5, %6 : vector<8x64xf32>
    %c0_6 = arith.constant 0 : index
    %c0_7 = arith.constant 0 : index
    %8 = vector.load %arg4[%c0_6, %c0_7] : memref<64x128xf32, #tpu.memory_space<vmem>>, vector<64x128xf32>
    %cst_8 = arith.constant dense<0.000000e+00> : vector<8x128xf32>
    %9 = tpu.matmul %7, %8, %cst_8 {dimension_numbers = #tpu.dot_dimension_numbers<[1], [0], [0], [1], [0, 0, 1, 1], [], []>} : vector<8x64xf32>, vector<64x128xf32>, vector<8x128xf32> -> vector<8x128xf32>
    %c0_9 = arith.constant 0 : index
    %c0_10 = arith.constant 0 : index
    %10 = vector.load %arg5[%c0_9, %c0_10] : memref<1x128xf32, #tpu.memory_space<vmem>>, vector<1x128xf32>
    %11 = vector.broadcast %10 : vector<1x128xf32> to vector<8x128xf32>
    %12 = arith.addf %9, %11 : vector<8x128xf32>
    %cst_11 = arith.constant 0.000000e+00 : f32
    %13 = vector.broadcast %cst_11 : f32 to vector<8x128xf32>
    %14 = arith.maximumf %12, %13 : vector<8x128xf32>
    %c0_12 = arith.constant 0 : index
    %c0_13 = arith.constant 0 : index
    %15 = vector.load %arg6[%c0_12, %c0_13] : memref<128x256xf32, #tpu.memory_space<vmem>>, vector<128x256xf32>
    %cst_14 = arith.constant dense<0.000000e+00> : vector<8x256xf32>
    %16 = tpu.matmul %14, %15, %cst_14 {dimension_numbers = #tpu.dot_dimension_numbers<[1], [0], [0], [1], [0, 0, 1, 1], [], []>} : vector<8x128xf32>, vector<128x256xf32>, vector<8x256xf32> -> vector<8x256xf32>
    %c0_15 = arith.constant 0 : index
    %c0_16 = arith.constant 0 : index
    %17 = vector.load %arg7[%c0_15, %c0_16] : memref<1x256xf32, #tpu.memory_space<vmem>>, vector<1x256xf32>
    %18 = vector.broadcast %17 : vector<1x256xf32> to vector<8x256xf32>
    %19 = arith.addf %16, %18 : vector<8x256xf32>
    %cst_17 = arith.constant 0.000000e+00 : f32
    %20 = vector.broadcast %cst_17 : f32 to vector<8x256xf32>
    %21 = arith.maximumf %19, %20 : vector<8x256xf32>
    %c0_18 = arith.constant 0 : index
    %c0_19 = arith.constant 0 : index
    %22 = vector.load %arg8[%c0_18, %c0_19] : memref<256x128xf32, #tpu.memory_space<vmem>>, vector<256x128xf32>
    %cst_20 = arith.constant dense<0.000000e+00> : vector<8x128xf32>
    %23 = tpu.matmul %21, %22, %cst_20 {dimension_numbers = #tpu.dot_dimension_numbers<[1], [0], [0], [1], [0, 0, 1, 1], [], []>} : vector<8x256xf32>, vector<256x128xf32>, vector<8x128xf32> -> vector<8x128xf32>
    %c0_21 = arith.constant 0 : index
    %c0_22 = arith.constant 0 : index
    %24 = vector.load %arg9[%c0_21, %c0_22] : memref<1x128xf32, #tpu.memory_space<vmem>>, vector<1x128xf32>
    %25 = vector.broadcast %24 : vector<1x128xf32> to vector<8x128xf32>
    %26 = arith.addf %23, %25 : vector<8x128xf32>
    %c0_23 = arith.constant 0 : index
    %c0_24 = arith.constant 0 : index
    %27 = vector.load %arg10[%c0_23, %c0_24] : memref<8x128xf32, #tpu.memory_space<vmem>>, vector<8x128xf32>
    tpu.vector_store %arg10[%c0_23, %c0_24], %26 {strides = array<i32>} : memref<8x128xf32, #tpu.memory_space<vmem>>, vector<8x128xf32>,
    return
  }
  func.func @transform_0(%arg0: i32) -> (i32, i32) {
    %c0_i32 = arith.constant 0 : i32
    %c0_i32_0 = arith.constant 0 : i32
    return %arg0, %c0_i32 : i32, i32
  }
  func.func @transform_1(%arg0: i32) -> (i32, i32) {
    %c0_i32 = arith.constant 0 : i32
    %c0_i32_0 = arith.constant 0 : i32
    %c0_i32_1 = arith.constant 0 : i32
    return %c0_i32, %c0_i32_0 : i32, i32
  }
  func.func @transform_2(%arg0: i32) -> (i32, i32) {
    %c0_i32 = arith.constant 0 : i32
    %c0_i32_0 = arith.constant 0 : i32
    %c0_i32_1 = arith.constant 0 : i32
    return %c0_i32, %c0_i32_0 : i32, i32
  }
  func.func @transform_3(%arg0: i32) -> (i32, i32) {
    %c0_i32 = arith.constant 0 : i32
    %c0_i32_0 = arith.constant 0 : i32
    %c0_i32_1 = arith.constant 0 : i32
    return %c0_i32, %c0_i32_0 : i32, i32
  }
  func.func @transform_4(%arg0: i32) -> (i32, i32) {
    %c0_i32 = arith.constant 0 : i32
    %c0_i32_0 = arith.constant 0 : i32
    %c0_i32_1 = arith.constant 0 : i32
    return %c0_i32, %c0_i32_0 : i32, i32
  }
  func.func @transform_5(%arg0: i32) -> (i32, i32) {
    %c0_i32 = arith.constant 0 : i32
    %c0_i32_0 = arith.constant 0 : i32
    %c0_i32_1 = arith.constant 0 : i32
    return %c0_i32, %c0_i32_0 : i32, i32
  }
  func.func @transform_6(%arg0: i32) -> (i32, i32) {
    %c0_i32 = arith.constant 0 : i32
    %c0_i32_0 = arith.constant 0 : i32
    %c0_i32_1 = arith.constant 0 : i32
    return %c0_i32, %c0_i32_0 : i32, i32
  }
  func.func @transform_7(%arg0: i32) -> (i32, i32) {
    %c0_i32 = arith.constant 0 : i32
    %c0_i32_0 = arith.constant 0 : i32
    %c0_i32_1 = arith.constant 0 : i32
    return %c0_i32, %c0_i32_0 : i32, i32
  }
  func.func @transform_8(%arg0: i32) -> (i32, i32) {
    %c0_i32 = arith.constant 0 : i32
    %c0_i32_0 = arith.constant 0 : i32
    %c0_i32_1 = arith.constant 0 : i32
    return %c0_i32, %c0_i32_0 : i32, i32
  }
  func.func @transform_9(%arg0: i32) -> (i32, i32) {
    %c0_i32 = arith.constant 0 : i32
    %c0_i32_0 = arith.constant 0 : i32
    return %arg0, %c0_i32 : i32, i32
  }
}

</mosaic_0001>

<llo_original>
// kernel: tpu_custom_call.1
$region0: #{tpu_custom_call.1}
  #allocation0 [shape = 'u32[]', space=smem, size = 0x4, offset = 0x4, fixed_abs, tag = 'smem constant byte address 0x4 - core index']
  #allocation1 [shape = 'u32[72,128]{1,0:T(1,128)}', space=vmem, size = 0x9000, scoped, tag = 'internal scratch']
  %s0 = inlined_call_operand.hbm [shape: f32[8,16], index: 0, kind: input, shape index: {}]
  %s1 = inlined_call_operand.hbm [shape: f32[16,64], index: 1, kind: input, shape index: {}]
  %s2 = inlined_call_operand.vmem [shape: f32[1,64], index: 2, kind: input, shape index: {}]
  %s3 = inlined_call_operand.hbm [shape: f32[64,128], index: 3, kind: input, shape index: {}]
  %s4 = inlined_call_operand.hbm [shape: f32[1,128], index: 4, kind: input, shape index: {}]
  %s5 = inlined_call_operand.hbm [shape: f32[128,256], index: 5, kind: input, shape index: {}]
  %s6 = inlined_call_operand.vmem [shape: f32[1,256], index: 6, kind: input, shape index: {}]
  %s7 = inlined_call_operand.hbm [shape: f32[256,128], index: 7, kind: input, shape index: {}]
  %s8 = inlined_call_operand.vmem [shape: f32[1,128], index: 8, kind: input, shape index: {}]
  %s9 = inlined_call_operand.hbm [shape: f32[8,128], index: 9, kind: output, shape index: {}]
  %s10 = sld [smem:[#allocation0]]
  $region70: #{tpu_custom_call.1} parent=0
    _
  %s12 = ssub.s32 1, %s10
  %s13 = scalar_select 0, %s12, %s10
  $region1: #{tpu_custom_call.1} parent=0
    #allocation2 [shape = 'u8[4096]{0}', space=vmem, size = 0x1000, scoped, tag = 'input window, operand 0, single buffered']
    #allocation3 [shape = 's32[1]{0}', space=sflag, size = 0x4, scoped, tag = 'scoped memory for tpu_custom_call.1']
    #allocation4 [shape = 's32[1]{0}', space=sflag, size = 0x4, scoped, tag = 'scoped memory for tpu_custom_call.1']
    #allocation5 [shape = 'u8[8192]{0}', space=vmem, size = 0x2000, scoped, tag = 'input window, operand 1, single buffered']
    #allocation6 [shape = 's32[1]{0}', space=sflag, size = 0x4, scoped, tag = 'scoped memory for tpu_custom_call.1']
    #allocation7 [shape = 'u8[32768]{0}', space=vmem, size = 0x8000, scoped, tag = 'input window, operand 3, single buffered']
    #allocation8 [shape = 'u8[512]{0}', space=vmem, size = 0x400, scoped, tag = 'input window, operand 4, single buffered']
    #allocation9 [shape = 's32[1]{0}', space=sflag, size = 0x4, scoped, tag = 'scoped memory for tpu_custom_call.1']
    #allocation10 [shape = 'u8[131072]{0}', space=vmem, size = 0x20000, scoped, tag = 'input window, operand 5, single buffered']
    #allocation11 [shape = 'u8[131072]{0}', space=vmem, size = 0x20000, scoped, tag = 'input window, operand 7, single buffered']
    #allocation12 [shape = 's32[1]{0}', space=sflag, size = 0x4, scoped, tag = 'scoped memory for tpu_custom_call.1']
    #allocation13 [shape = 'u8[4096]{0}', space=vmem, size = 0x1000, scoped, tag = 'output window, operand 0, single buffered']
    %14 = vsyncpa [#allocation3], 0
    %15 = vsyncpa [#allocation6], 0
    %16 = vsyncpa [#allocation9], 0
    %17 = vsyncpa [#allocation12], 0
    %18 = vsyncpa [#allocation4], 0
    // Predicated region
    $region2: #{tpu_custom_call.1} parent=1 // pred_check
      _
    $region3: #{tpu_custom_call.1} parent=1 // pred_check_branch
      %20 = sbr.rel (0) target = $region5
    $region4: #{tpu_custom_call.1} parent=1 // pred_region
      %22 = vsyncadd [#allocation3], 0
      %s24 = sshll.u32 %s0, 4
      %s25 = int_to_ptr.hbm [resolvable:$true] %s24
      %s26 = sshll.u32 [#allocation2], 4
      %s27 = int_to_ptr.vmem [resolvable:$true] %s26
      %29 = dma.hbm_to_vmem [thread:$0]  %s25, 128, %s27, [#allocation3]
    $region5: #{tpu_custom_call.1} parent=1 // pred_fallthru
      _
    // Predicated region
    $region6: #{tpu_custom_call.1} parent=1 // pred_check
      _
    $region7: #{tpu_custom_call.1} parent=1 // pred_check_branch
      %31 = sbr.rel (0) target = $region9
    $region8: #{tpu_custom_call.1} parent=1 // pred_region
      %33 = vsyncadd [#allocation6], 0
      %s34 = sshll.u32 %s1, 4
      %s35 = int_to_ptr.hbm [resolvable:$true] %s34
      %s36 = sshll.u32 [#allocation5], 4
      %s37 = int_to_ptr.vmem [resolvable:$true] %s36
      %42 = dma.hbm_to_vmem [thread:$0]  %s35, 256, %s37, [#allocation6], 128, 128, 8
    $region9: #{tpu_custom_call.1} parent=1 // pred_fallthru
      _
    // Predicated region
    $region10: #{tpu_custom_call.1} parent=1 // pred_check
      _
    $region11: #{tpu_custom_call.1} parent=1 // pred_check_branch
      %44 = sbr.rel (0) target = $region13
    $region12: #{tpu_custom_call.1} parent=1 // pred_region
      _
    $region13: #{tpu_custom_call.1} parent=1 // pred_fallthru
      _
    // Predicated region
    $region14: #{tpu_custom_call.1} parent=1 // pred_check
      _
    $region15: #{tpu_custom_call.1} parent=1 // pred_check_branch
      %46 = sbr.rel (0) target = $region17
    $region16: #{tpu_custom_call.1} parent=1 // pred_region
      %48 = vsyncadd [#allocation6], 0
      %s49 = sshll.u32 %s3, 4
      %s50 = int_to_ptr.hbm [resolvable:$true] %s49
      %s51 = sshll.u32 [#allocation7], 4
      %s52 = int_to_ptr.vmem [resolvable:$true] %s51
      %57 = dma.hbm_to_vmem [thread:$0]  %s50, 1024, %s52, [#allocation6], 128, 128, 8
    $region17: #{tpu_custom_call.1} parent=1 // pred_fallthru
      _
    // Predicated region
    $region18: #{tpu_custom_call.1} parent=1 // pred_check
      _
    $region19: #{tpu_custom_call.1} parent=1 // pred_check_branch
      %59 = sbr.rel (0) target = $region21
    $region20: #{tpu_custom_call.1} parent=1 // pred_region
      %61 = vsyncadd [#allocation9], 0
      %s63 = sshll.u32 %s4, 4
      %s64 = int_to_ptr.hbm [resolvable:$true] %s63
      %s65 = sshll.u32 [#allocation8], 4
      %s66 = int_to_ptr.vmem [resolvable:$true] %s65
      %68 = dma.hbm_to_vmem [thread:$0]  %s64, 16, %s66, [#allocation9]
    $region21: #{tpu_custom_call.1} parent=1 // pred_fallthru
      _
    // Predicated region
    $region22: #{tpu_custom_call.1} parent=1 // pred_check
      _
    $region23: #{tpu_custom_call.1} parent=1 // pred_check_branch
      %70 = sbr.rel (0) target = $region25
    $region24: #{tpu_custom_call.1} parent=1 // pred_region
      %72 = vsyncadd [#allocation9], 0
      %s73 = sshll.u32 %s5, 4
      %s74 = int_to_ptr.hbm [resolvable:$true] %s73
      %s75 = sshll.u32 [#allocation10], 4
      %s76 = int_to_ptr.vmem [resolvable:$true] %s75
      %81 = dma.hbm_to_vmem [thread:$0]  %s74, 4096, %s76, [#allocation9], 256, 256, 16
    $region25: #{tpu_custom_call.1} parent=1 // pred_fallthru
      _
    // Predicated region
    $region26: #{tpu_custom_call.1} parent=1 // pred_check
      _
    $region27: #{tpu_custom_call.1} parent=1 // pred_check_branch
      %83 = sbr.rel (0) target = $region29
    $region28: #{tpu_custom_call.1} parent=1 // pred_region
      _
    $region29: #{tpu_custom_call.1} parent=1 // pred_fallthru
      _
    // Predicated region
    $region30: #{tpu_custom_call.1} parent=1 // pred_check
      _
    $region31: #{tpu_custom_call.1} parent=1 // pred_check_branch
      %85 = sbr.rel (0) target = $region33
    $region32: #{tpu_custom_call.1} parent=1 // pred_region
      %87 = vsyncadd [#allocation12], 0
      %s88 = sshll.u32 %s7, 4
      %s89 = int_to_ptr.hbm [resolvable:$true] %s88
      %s90 = sshll.u32 [#allocation11], 4
      %s91 = int_to_ptr.vmem [resolvable:$true] %s90
      %96 = dma.hbm_to_vmem [thread:$0]  %s89, 4096, %s91, [#allocation12], 128, 128, 8
    $region33: #{tpu_custom_call.1} parent=1 // pred_fallthru
      _
    // Predicated region
    $region34: #{tpu_custom_call.1} parent=1 // pred_check
      _
    $region35: #{tpu_custom_call.1} parent=1 // pred_check_branch
      %98 = sbr.rel (0) target = $region37
    $region36: #{tpu_custom_call.1} parent=1 // pred_region
      _
    $region37: #{tpu_custom_call.1} parent=1 // pred_fallthru
      _
    // Predicated region
    $region38: #{tpu_custom_call.1} parent=1 // pred_check
      _
    $region39: #{tpu_custom_call.1} parent=1 // pred_check_branch
      %100 = sbr.rel (0) target = $region41
    $region40: #{tpu_custom_call.1} parent=1 // pred_region
      %102 = dma.done [#allocation3], 128
    $region41: #{tpu_custom_call.1} parent=1 // pred_fallthru
      _
    // Predicated region
    $region42: #{tpu_custom_call.1} parent=1 // pred_check
      _
    $region43: #{tpu_custom_call.1} parent=1 // pred_check_branch
      %104 = sbr.rel (0) target = $region45
    $region44: #{tpu_custom_call.1} parent=1 // pred_region
      %106 = dma.done [#allocation6], 256
    $region45: #{tpu_custom_call.1} parent=1 // pred_fallthru
      _
    // Predicated region
    $region46: #{tpu_custom_call.1} parent=1 // pred_check
      _
    $region47: #{tpu_custom_call.1} parent=1 // pred_check_branch
      %108 = sbr.rel (0) target = $region49
    $region48: #{tpu_custom_call.1} parent=1 // pred_region
      %110 = dma.done [#allocation6], 1024
    $region49: #{tpu_custom_call.1} parent=1 // pred_fallthru
      _
    // Predicated region
    $region50: #{tpu_custom_call.1} parent=1 // pred_check
      _
    $region51: #{tpu_custom_call.1} parent=1 // pred_check_branch
      %112 = sbr.rel (0) target = $region53
    $region52: #{tpu_custom_call.1} parent=1 // pred_region
      %114 = dma.done [#allocation9], 16
    $region53: #{tpu_custom_call.1} parent=1 // pred_fallthru
      _
    // Predicated region
    $region54: #{tpu_custom_call.1} parent=1 // pred_check
      _
    $region55: #{tpu_custom_call.1} parent=1 // pred_check_branch
      %116 = sbr.rel (0) target = $region57
    $region56: #{tpu_custom_call.1} parent=1 // pred_region
      %118 = dma.done [#allocation9], 4096
    $region57: #{tpu_custom_call.1} parent=1 // pred_fallthru
      _
    // Predicated region
    $region58: #{tpu_custom_call.1} parent=1 // pred_check
      _
    $region59: #{tpu_custom_call.1} parent=1 // pred_check_branch
      %120 = sbr.rel (0) target = $region61
    $region60: #{tpu_custom_call.1} parent=1 // pred_region
      %122 = dma.done [#allocation12], 4096
    $region61: #{tpu_custom_call.1} parent=1 // pred_fallthru
      _
    %v123 = vld [vmem:[#allocation2] sm:$0xff]
    %v124 = vld [vmem:[#allocation5] sm:$0xff]
    %v125 = vld [vmem:[#allocation5 + $0x8] sm:$0xff]
    %v126 = vld [vmem:[%s2] sm:$0x1]
    %v128 = vperm.slane %v126, 0
    %vm130 = vcmask 130048
    %v132 = vsel %vm130, %v123, 0
    %134 = vmatpush.msra.mxu0 0.0
    %135 = vmatpush.msra.mxu0 0.0
    %136 = vmatpush.msra.mxu0 0.0
    %137 = vmatpush.msra.mxu0 0.0
    %138 = vmatpush.msra.mxu0 0.0
    %139 = vmatpush.msra.mxu0 0.0
    %140 = vmatpush.msra.mxu0 0.0
    %141 = vmatpush.msra.mxu0 0.0
    %142 = vmatpush.msra.mxu0 0.0
    %143 = vmatpush.msra.mxu0 0.0
    %144 = vmatpush.msra.mxu0 0.0
    %145 = vmatpush.msra.mxu0 0.0
    %146 = vmatpush.msra.mxu0 0.0
    %147 = vmatpush.msra.mxu0 0.0
    %148 = vmatpush.msra.mxu0 %v125
    %149 = vmatpush.msra.mxu0 %v124
    %150 = vmatmul.f32.gmra.mxu0 %v132
    %v151 = vpop.f32.mrf.mxu0
    %v152 = vadd.f32 %v128, %v151
    %153 = vdwg.mxu0
    %v154 = vmax.f32 %v152, 0.0
    %v155 = vld [vmem:[#allocation7] sm:$0xff]
    %v156 = vld [vmem:[#allocation7 + $0x8] sm:$0xff]
    %v157 = vld [vmem:[#allocation7 + $0x10] sm:$0xff]
    %v158 = vld [vmem:[#allocation7 + $0x18] sm:$0xff]
    %v159 = vld [vmem:[#allocation7 + $0x20] sm:$0xff]
    %v160 = vld [vmem:[#allocation7 + $0x28] sm:$0xff]
    %v161 = vld [vmem:[#allocation7 + $0x30] sm:$0xff]
    %v162 = vld [vmem:[#allocation7 + $0x38] sm:$0xff]
    %v163 = vld [vmem:[#allocation8] sm:$0x1]
    %v165 = vperm.slane %v163, 0
    %vm167 = vcmask 523264
    %v169 = vsel %vm167, %v154, 0
    %171 = vmatpush.msra.mxu0 0.0
    %172 = vmatpush.msra.mxu0 0.0
    %173 = vmatpush.msra.mxu0 0.0
    %174 = vmatpush.msra.mxu0 0.0
    %175 = vmatpush.msra.mxu0 0.0
    %176 = vmatpush.msra.mxu0 0.0
    %177 = vmatpush.msra.mxu0 0.0
    %178 = vmatpush.msra.mxu0 0.0
    %179 = vmatpush.msra.mxu0 %v162
    %180 = vmatpush.msra.mxu0 %v161
    %181 = vmatpush.msra.mxu0 %v160
    %182 = vmatpush.msra.mxu0 %v159
    %183 = vmatpush.msra.mxu0 %v158
    %184 = vmatpush.msra.mxu0 %v157
    %185 = vmatpush.msra.mxu0 %v156
    %186 = vmatpush.msra.mxu0 %v155
    %187 = vmatmul.f32.gmra.mxu0 %v169
    %v188 = vpop.f32.mrf.mxu0
    %v189 = vadd.f32 %v165, %v188
    %190 = vdwg.mxu0
    %v191 = vmax.f32 %v189, 0.0
    %v192 = vld [vmem:[#allocation10] sm:$0xff]
    %v193 = vld [vmem:[#allocation10 + $0x8] sm:$0xff]
    %v194 = vld [vmem:[#allocation10 + $0x10] sm:$0xff]
    %v195 = vld [vmem:[#allocation10 + $0x18] sm:$0xff]
    %v196 = vld [vmem:[#allocation10 + $0x20] sm:$0xff]
    %v197 = vld [vmem:[#allocation10 + $0x28] sm:$0xff]
    %v198 = vld [vmem:[#allocation10 + $0x30] sm:$0xff]
    %v199 = vld [vmem:[#allocation10 + $0x38] sm:$0xff]
    %v200 = vld [vmem:[#allocation10 + $0x40] sm:$0xff]
    %v201 = vld [vmem:[#allocation10 + $0x48] sm:$0xff]
    %v202 = vld [vmem:[#allocation10 + $0x50] sm:$0xff]
    %v203 = vld [vmem:[#allocation10 + $0x58] sm:$0xff]
    %v204 = vld [vmem:[#allocation10 + $0x60] sm:$0xff]
    %v205 = vld [vmem:[#allocation10 + $0x68] sm:$0xff]
    %v206 = vld [vmem:[#allocation10 + $0x70] sm:$0xff]
    %v207 = vld [vmem:[#allocation10 + $0x78] sm:$0xff]
    %v208 = vld [vmem:[#allocation10 + $0x80] sm:$0xff]
    %v209 = vld [vmem:[#allocation10 + $0x88] sm:$0xff]
    %v210 = vld [vmem:[#allocation10 + $0x90] sm:$0xff]
    %v211 = vld [vmem:[#allocation10 + $0x98] sm:$0xff]
    %v212 = vld [vmem:[#allocation10 + $0xa0] sm:$0xff]
    %v213 = vld [vmem:[#allocation10 + $0xa8] sm:$0xff]
    %v214 = vld [vmem:[#allocation10 + $0xb0] sm:$0xff]
    %v215 = vld [vmem:[#allocation10 + $0xb8] sm:$0xff]
    %v216 = vld [vmem:[#allocation10 + $0xc0] sm:$0xff]
    %v217 = vld [vmem:[#allocation10 + $0xc8] sm:$0xff]
    %v218 = vld [vmem:[#allocation10 + $0xd0] sm:$0xff]
    %v219 = vld [vmem:[#allocation10 + $0xd8] sm:$0xff]
    %v220 = vld [vmem:[#allocation10 + $0xe0] sm:$0xff]
    %v221 = vld [vmem:[#allocation10 + $0xe8] sm:$0xff]
    %v222 = vld [vmem:[#allocation10 + $0xf0] sm:$0xff]
    %v223 = vld [vmem:[#allocation10 + $0xf8] sm:$0xff]
    %v224 = vld [vmem:[%s6] sm:$0x3]
    %v226 = vperm.slane %v224, 0
    %v227 = vperm.slane %v224, 1
    %230 = vmatpush.msra.mxu0 %v222
    %231 = vmatpush.msra.mxu0 %v220
    %232 = vmatpush.msra.mxu0 %v218
    %233 = vmatpush.msra.mxu0 %v216
    %234 = vmatpush.msra.mxu0 %v214
    %235 = vmatpush.msra.mxu0 %v212
    %236 = vmatpush.msra.mxu0 %v210
    %237 = vmatpush.msra.mxu0 %v208
    %238 = vmatpush.msra.mxu0 %v206
    %239 = vmatpush.msra.mxu0 %v204
    %240 = vmatpush.msra.mxu0 %v202
    %241 = vmatpush.msra.mxu0 %v200
    %242 = vmatpush.msra.mxu0 %v198
    %243 = vmatpush.msra.mxu0 %v196
    %244 = vmatpush.msra.mxu0 %v194
    %245 = vmatpush.msra.mxu0 %v192
    %246 = vmatmul.f32.gmra.mxu0 %v191
    %v247 = vpop.f32.mrf.mxu0
    %v248 = vadd.f32 %v226, %v247
    %249 = vdwg.mxu0
    %250 = vmatpush.msra.mxu0 %v223
    %251 = vmatpush.msra.mxu0 %v221
    %252 = vmatpush.msra.mxu0 %v219
    %253 = vmatpush.msra.mxu0 %v217
    %254 = vmatpush.msra.mxu0 %v215
    %255 = vmatpush.msra.mxu0 %v213
    %256 = vmatpush.msra.mxu0 %v211
    %257 = vmatpush.msra.mxu0 %v209
    %258 = vmatpush.msra.mxu0 %v207
    %259 = vmatpush.msra.mxu0 %v205
    %260 = vmatpush.msra.mxu0 %v203
    %261 = vmatpush.msra.mxu0 %v201
    %262 = vmatpush.msra.mxu0 %v199
    %263 = vmatpush.msra.mxu0 %v197
    %264 = vmatpush.msra.mxu0 %v195
    %265 = vmatpush.msra.mxu0 %v193
    %266 = vmatmul.f32.gmra.mxu0 %v191
    %v267 = vpop.f32.mrf.mxu0
    %v268 = vadd.f32 %v227, %v267
    %269 = vdwg.mxu0
    %v270 = vmax.f32 %v248, 0.0
    %v271 = vmax.f32 %v268, 0.0
    %v272 = vld [vmem:[#allocation11] sm:$0xff]
    %v273 = vld [vmem:[#allocation11 + $0x8] sm:$0xff]
    %v274 = vld [vmem:[#allocation11 + $0x10] sm:$0xff]
    %v275 = vld [vmem:[#allocation11 + $0x18] sm:$0xff]
    %v276 = vld [vmem:[#allocation11 + $0x20] sm:$0xff]
    %v277 = vld [vmem:[#allocation11 + $0x28] sm:$0xff]
    %v278 = vld [vmem:[#allocation11 + $0x30] sm:$0xff]
    %v279 = vld [vmem:[#allocation11 + $0x38] sm:$0xff]
    %v280 = vld [vmem:[#allocation11 + $0x40] sm:$0xff]
    %v281 = vld [vmem:[#allocation11 + $0x48] sm:$0xff]
    %v282 = vld [vmem:[#allocation11 + $0x50] sm:$0xff]
    %v283 = vld [vmem:[#allocation11 + $0x58] sm:$0xff]
    %v284 = vld [vmem:[#allocation11 + $0x60] sm:$0xff]
    %v285 = vld [vmem:[#allocation11 + $0x68] sm:$0xff]
    %v286 = vld [vmem:[#allocation11 + $0x70] sm:$0xff]
    %v287 = vld [vmem:[#allocation11 + $0x78] sm:$0xff]
    %v288 = vld [vmem:[#allocation11 + $0x80] sm:$0xff]
    %v289 = vld [vmem:[#allocation11 + $0x88] sm:$0xff]
    %v290 = vld [vmem:[#allocation11 + $0x90] sm:$0xff]
    %v291 = vld [vmem:[#allocation11 + $0x98] sm:$0xff]
    %v292 = vld [vmem:[#allocation11 + $0xa0] sm:$0xff]
    %v293 = vld [vmem:[#allocation11 + $0xa8] sm:$0xff]
    %v294 = vld [vmem:[#allocation11 + $0xb0] sm:$0xff]
    %v295 = vld [vmem:[#allocation11 + $0xb8] sm:$0xff]
    %v296 = vld [vmem:[#allocation11 + $0xc0] sm:$0xff]
    %v297 = vld [vmem:[#allocation11 + $0xc8] sm:$0xff]
    %v298 = vld [vmem:[#allocation11 + $0xd0] sm:$0xff]
    %v299 = vld [vmem:[#allocation11 + $0xd8] sm:$0xff]
    %v300 = vld [vmem:[#allocation11 + $0xe0] sm:$0xff]
    %v301 = vld [vmem:[#allocation11 + $0xe8] sm:$0xff]
    %v302 = vld [vmem:[#allocation11 + $0xf0] sm:$0xff]
    %v303 = vld [vmem:[#allocation11 + $0xf8] sm:$0xff]
    %v304 = vld [vmem:[%s8] sm:$0x1]
    %v306 = vperm.slane %v304, 0
    %308 = vmatpush.msra.mxu0 %v287
    %309 = vmatpush.msra.mxu0 %v286
    %310 = vmatpush.msra.mxu0 %v285
    %311 = vmatpush.msra.mxu0 %v284
    %312 = vmatpush.msra.mxu0 %v283
    %313 = vmatpush.msra.mxu0 %v282
    %314 = vmatpush.msra.mxu0 %v281
    %315 = vmatpush.msra.mxu0 %v280
    %316 = vmatpush.msra.mxu0 %v279
    %317 = vmatpush.msra.mxu0 %v278
    %318 = vmatpush.msra.mxu0 %v277
    %319 = vmatpush.msra.mxu0 %v276
    %320 = vmatpush.msra.mxu0 %v275
    %321 = vmatpush.msra.mxu0 %v274
    %322 = vmatpush.msra.mxu0 %v273
    %323 = vmatpush.msra.mxu0 %v272
    %324 = vmatmul.f32.gmra.mxu0 %v270
    %v325 = vpop.f32.mrf.mxu0
    %v326 = vadd.f32 %v306, %v325
    %327 = vdwg.mxu0
    %328 = vmatpush.msra.mxu0 %v303
    %329 = vmatpush.msra.mxu0 %v302
    %330 = vmatpush.msra.mxu0 %v301
    %331 = vmatpush.msra.mxu0 %v300
    %332 = vmatpush.msra.mxu0 %v299
    %333 = vmatpush.msra.mxu0 %v298
    %334 = vmatpush.msra.mxu0 %v297
    %335 = vmatpush.msra.mxu0 %v296
    %336 = vmatpush.msra.mxu0 %v295
    %337 = vmatpush.msra.mxu0 %v294
    %338 = vmatpush.msra.mxu0 %v293
    %339 = vmatpush.msra.mxu0 %v292
    %340 = vmatpush.msra.mxu0 %v291
    %341 = vmatpush.msra.mxu0 %v290
    %342 = vmatpush.msra.mxu0 %v289
    %343 = vmatpush.msra.mxu0 %v288
    %344 = vmatmul.f32.gmra.mxu0 %v271
    %v345 = vpop.f32.mrf.mxu0
    %v346 = vadd.f32 %v326, %v345
    %347 = vdwg.mxu0
    %348 = vst [vmem:[#allocation13] sm:$0xff] %v346
    // Predicated region
    $region62: #{tpu_custom_call.1} parent=1 // pred_check
      _
    $region63: #{tpu_custom_call.1} parent=1 // pred_check_branch
      %350 = sbr.rel (0) target = $region65
    $region64: #{tpu_custom_call.1} parent=1 // pred_region
      %352 = vsyncadd [#allocation4], 0
      %s354 = sshll.u32 [#allocation13], 4
      %s355 = int_to_ptr.vmem [resolvable:$true] %s354
      %s356 = sshll.u32 %s9, 4
      %s357 = int_to_ptr.hbm [resolvable:$true] %s356
      %359 = dma.vmem_to_hbm [thread:$0]  %s355, 128, %s357, [#allocation4]
    $region65: #{tpu_custom_call.1} parent=1 // pred_fallthru
      _
    // Predicated region
    $region66: #{tpu_custom_call.1} parent=1 // pred_check
      _
    $region67: #{tpu_custom_call.1} parent=1 // pred_check_branch
      %361 = sbr.rel (0) target = $region69
    $region68: #{tpu_custom_call.1} parent=1 // pred_region
      %363 = dma.done [#allocation4], 128
    $region69: #{tpu_custom_call.1} parent=1 // pred_fallthru
      _
    %364 = vsyncpa [#allocation3], 1
    %365 = vsyncpa [#allocation6], 1
    %366 = vsyncpa [#allocation9], 1
    %367 = vsyncpa [#allocation12], 1
    %368 = vsyncpa [#allocation4], 1

// kernel: tpu_custom_call.1
$region0: #{tpu_custom_call.1}
  #allocation0 [shape = 'u32[]', space=smem, size = 0x4, offset = 0x4, fixed_abs, tag = 'smem constant byte address 0x4 - core index']
  #allocation1 [shape = 'u32[72,128]{1,0:T(1,128)}', space=vmem, size = 0x9000, scoped, tag = 'internal scratch']
  %s0 = inlined_call_operand.hbm [shape: f32[8,16], index: 0, kind: input, shape index: {}]
  %s1 = inlined_call_operand.hbm [shape: f32[16,64], index: 1, kind: input, shape index: {}]
  %s2 = inlined_call_operand.vmem [shape: f32[1,64], index: 2, kind: input, shape index: {}]
  %s3 = inlined_call_operand.hbm [shape: f32[64,128], index: 3, kind: input, shape index: {}]
  %s4 = inlined_call_operand.hbm [shape: f32[1,128], index: 4, kind: input, shape index: {}]
  %s5 = inlined_call_operand.hbm [shape: f32[128,256], index: 5, kind: input, shape index: {}]
  %s6 = inlined_call_operand.vmem [shape: f32[1,256], index: 6, kind: input, shape index: {}]
  %s7 = inlined_call_operand.hbm [shape: f32[256,128], index: 7, kind: input, shape index: {}]
  %s8 = inlined_call_operand.vmem [shape: f32[1,128], index: 8, kind: input, shape index: {}]
  %s9 = inlined_call_operand.hbm [shape: f32[8,128], index: 9, kind: output, shape index: {}]
  %s10 = sld [smem:[#allocation0]]
  $region70: #{tpu_custom_call.1} parent=0
    _
  %s12 = ssub.s32 1, %s10
  %s13 = scalar_select 0, %s12, %s10
  $region1: #{tpu_custom_call.1} parent=0
    #allocation2 [shape = 'u8[4096]{0}', space=vmem, size = 0x1000, scoped, tag = 'input window, operand 0, single buffered']
    #allocation3 [shape = 's32[1]{0}', space=sflag, size = 0x4, scoped, tag = 'scoped memory for tpu_custom_call.1']
    #allocation4 [shape = 's32[1]{0}', space=sflag, size = 0x4, scoped, tag = 'scoped memory for tpu_custom_call.1']
    #allocation5 [shape = 'u8[8192]{0}', space=vmem, size = 0x2000, scoped, tag = 'input window, operand 1, single buffered']
    #allocation6 [shape = 's32[1]{0}', space=sflag, size = 0x4, scoped, tag = 'scoped memory for tpu_custom_call.1']
    #allocation7 [shape = 'u8[32768]{0}', space=vmem, size = 0x8000, scoped, tag = 'input window, operand 3, single buffered']
    #allocation8 [shape = 'u8[512]{0}', space=vmem, size = 0x400, scoped, tag = 'input window, operand 4, single buffered']
    #allocation9 [shape = 's32[1]{0}', space=sflag, size = 0x4, scoped, tag = 'scoped memory for tpu_custom_call.1']
    #allocation10 [shape = 'u8[131072]{0}', space=vmem, size = 0x20000, scoped, tag = 'input window, operand 5, single buffered']
    #allocation11 [shape = 'u8[131072]{0}', space=vmem, size = 0x20000, scoped, tag = 'input window, operand 7, single buffered']
    #allocation12 [shape = 's32[1]{0}', space=sflag, size = 0x4, scoped, tag = 'scoped memory for tpu_custom_call.1']
    #allocation13 [shape = 'u8[4096]{0}', space=vmem, size = 0x1000, scoped, tag = 'output window, operand 0, single buffered']
    %14 = vsyncpa [#allocation3], 0
    %15 = vsyncpa [#allocation6], 0
    %16 = vsyncpa [#allocation9], 0
    %17 = vsyncpa [#allocation12], 0
    %18 = vsyncpa [#allocation4], 0
    // Predicated region
    $region2: #{tpu_custom_call.1} parent=1 // pred_check
      _
    $region3: #{tpu_custom_call.1} parent=1 // pred_check_branch
      %20 = sbr.rel (0) target = $region5
    $region4: #{tpu_custom_call.1} parent=1 // pred_region
      %22 = vsyncadd [#allocation3], 0
      %s24 = sshll.u32 %s0, 4
      %s25 = int_to_ptr.hbm [resolvable:$true] %s24
      %s26 = sshll.u32 [#allocation2], 4
      %s27 = int_to_ptr.vmem [resolvable:$true] %s26
      %29 = dma.hbm_to_vmem [thread:$0]  %s25, 128, %s27, [#allocation3]
    $region5: #{tpu_custom_call.1} parent=1 // pred_fallthru
      _
    // Predicated region
    $region6: #{tpu_custom_call.1} parent=1 // pred_check
      _
    $region7: #{tpu_custom_call.1} parent=1 // pred_check_branch
      %31 = sbr.rel (0) target = $region9
    $region8: #{tpu_custom_call.1} parent=1 // pred_region
      %33 = vsyncadd [#allocation6], 0
      %s34 = sshll.u32 %s1, 4
      %s35 = int_to_ptr.hbm [resolvable:$true] %s34
      %s36 = sshll.u32 [#allocation5], 4
      %s37 = int_to_ptr.vmem [resolvable:$true] %s36
      %42 = dma.hbm_to_vmem [thread:$0]  %s35, 256, %s37, [#allocation6], 128, 128, 8
    $region9: #{tpu_custom_call.1} parent=1 // pred_fallthru
      _
    // Predicated region
    $region10: #{tpu_custom_call.1} parent=1 // pred_check
      _
    $region11: #{tpu_custom_call.1} parent=1 // pred_check_branch
      %44 = sbr.rel (0) target = $region13
    $region12: #{tpu_custom_call.1} parent=1 // pred_region
      _
    $region13: #{tpu_custom_call.1} parent=1 // pred_fallthru
      _
    // Predicated region
    $region14: #{tpu_custom_call.1} parent=1 // pred_check
      _
    $region15: #{tpu_custom_call.1} parent=1 // pred_check_branch
      %46 = sbr.rel (0) target = $region17
    $region16: #{tpu_custom_call.1} parent=1 // pred_region
      %48 = vsyncadd [#allocation6], 0
      %s49 = sshll.u32 %s3, 4
      %s50 = int_to_ptr.hbm [resolvable:$true] %s49
      %s51 = sshll.u32 [#allocation7], 4
      %s52 = int_to_ptr.vmem [resolvable:$true] %s51
      %57 = dma.hbm_to_vmem [thread:$0]  %s50, 1024, %s52, [#allocation6], 128, 128, 8
    $region17: #{tpu_custom_call.1} parent=1 // pred_fallthru
      _
    // Predicated region
    $region18: #{tpu_custom_call.1} parent=1 // pred_check
      _
    $region19: #{tpu_custom_call.1} parent=1 // pred_check_branch
      %59 = sbr.rel (0) target = $region21
    $region20: #{tpu_custom_call.1} parent=1 // pred_region
      %61 = vsyncadd [#allocation9], 0
      %s63 = sshll.u32 %s4, 4
      %s64 = int_to_ptr.hbm [resolvable:$true] %s63
      %s65 = sshll.u32 [#allocation8], 4
      %s66 = int_to_ptr.vmem [resolvable:$true] %s65
      %68 = dma.hbm_to_vmem [thread:$0]  %s64, 16, %s66, [#allocation9]
    $region21: #{tpu_custom_call.1} parent=1 // pred_fallthru
      _
    // Predicated region
    $region22: #{tpu_custom_call.1} parent=1 // pred_check
      _
    $region23: #{tpu_custom_call.1} parent=1 // pred_check_branch
      %70 = sbr.rel (0) target = $region25
    $region24: #{tpu_custom_call.1} parent=1 // pred_region
      %72 = vsyncadd [#allocation9], 0
      %s73 = sshll.u32 %s5, 4
      %s74 = int_to_ptr.hbm [resolvable:$true] %s73
      %s75 = sshll.u32 [#allocation10], 4
      %s76 = int_to_ptr.vmem [resolvable:$true] %s75
      %81 = dma.hbm_to_vmem [thread:$0]  %s74, 4096, %s76, [#allocation9], 256, 256, 16
    $region25: #{tpu_custom_call.1} parent=1 // pred_fallthru
      _
    // Predicated region
    $region26: #{tpu_custom_call.1} parent=1 // pred_check
      _
    $region27: #{tpu_custom_call.1} parent=1 // pred_check_branch
      %83 = sbr.rel (0) target = $region29
    $region28: #{tpu_custom_call.1} parent=1 // pred_region
      _
    $region29: #{tpu_custom_call.1} parent=1 // pred_fallthru
      _
    // Predicated region
    $region30: #{tpu_custom_call.1} parent=1 // pred_check
      _
    $region31: #{tpu_custom_call.1} parent=1 // pred_check_branch
      %85 = sbr.rel (0) target = $region33
    $region32: #{tpu_custom_call.1} parent=1 // pred_region
      %87 = vsyncadd [#allocation12], 0
      %s88 = sshll.u32 %s7, 4
      %s89 = int_to_ptr.hbm [resolvable:$true] %s88
      %s90 = sshll.u32 [#allocation11], 4
      %s91 = int_to_ptr.vmem [resolvable:$true] %s90
      %96 = dma.hbm_to_vmem [thread:$0]  %s89, 4096, %s91, [#allocation12], 128, 128, 8
    $region33: #{tpu_custom_call.1} parent=1 // pred_fallthru
      _
    // Predicated region
    $region34: #{tpu_custom_call.1} parent=1 // pred_check
      _
    $region35: #{tpu_custom_call.1} parent=1 // pred_check_branch
      %98 = sbr.rel (0) target = $region37
    $region36: #{tpu_custom_call.1} parent=1 // pred_region
      _
    $region37: #{tpu_custom_call.1} parent=1 // pred_fallthru
      _
    // Predicated region
    $region38: #{tpu_custom_call.1} parent=1 // pred_check
      _
    $region39: #{tpu_custom_call.1} parent=1 // pred_check_branch
      %100 = sbr.rel (0) target = $region41
    $region40: #{tpu_custom_call.1} parent=1 // pred_region
      %102 = dma.done [#allocation3], 128
    $region41: #{tpu_custom_call.1} parent=1 // pred_fallthru
      _
    // Predicated region
    $region42: #{tpu_custom_call.1} parent=1 // pred_check
      _
    $region43: #{tpu_custom_call.1} parent=1 // pred_check_branch
      %104 = sbr.rel (0) target = $region45
    $region44: #{tpu_custom_call.1} parent=1 // pred_region
      %106 = dma.done [#allocation6], 256
    $region45: #{tpu_custom_call.1} parent=1 // pred_fallthru
      _
    // Predicated region
    $region46: #{tpu_custom_call.1} parent=1 // pred_check
      _
    $region47: #{tpu_custom_call.1} parent=1 // pred_check_branch
      %108 = sbr.rel (0) target = $region49
    $region48: #{tpu_custom_call.1} parent=1 // pred_region
      %110 = dma.done [#allocation6], 1024
    $region49: #{tpu_custom_call.1} parent=1 // pred_fallthru
      _
    // Predicated region
    $region50: #{tpu_custom_call.1} parent=1 // pred_check
      _
    $region51: #{tpu_custom_call.1} parent=1 // pred_check_branch
      %112 = sbr.rel (0) target = $region53
    $region52: #{tpu_custom_call.1} parent=1 // pred_region
      %114 = dma.done [#allocation9], 16
    $region53: #{tpu_custom_call.1} parent=1 // pred_fallthru
      _
    // Predicated region
    $region54: #{tpu_custom_call.1} parent=1 // pred_check
      _
    $region55: #{tpu_custom_call.1} parent=1 // pred_check_branch
      %116 = sbr.rel (0) target = $region57
    $region56: #{tpu_custom_call.1} parent=1 // pred_region
      %118 = dma.done [#allocation9], 4096
    $region57: #{tpu_custom_call.1} parent=1 // pred_fallthru
      _
    // Predicated region
    $region58: #{tpu_custom_call.1} parent=1 // pred_check
      _
    $region59: #{tpu_custom_call.1} parent=1 // pred_check_branch
      %120 = sbr.rel (0) target = $region61
    $region60: #{tpu_custom_call.1} parent=1 // pred_region
      %122 = dma.done [#allocation12], 4096
    $region61: #{tpu_custom_call.1} parent=1 // pred_fallthru
      _
    %v123 = vld [vmem:[#allocation2] sm:$0xff]
    %v124 = vld [vmem:[#allocation5] sm:$0xff]
    %v125 = vld [vmem:[#allocation5 + $0x8] sm:$0xff]
    %v126 = vld [vmem:[%s2] sm:$0x1]
    %v128 = vperm.slane %v126, 0
    %vm130 = vcmask 130048
    %v132 = vsel %vm130, %v123, 0
    %134 = vmatpush.msra.mxu0 0.0
    %135 = vmatpush.msra.mxu0 0.0
    %136 = vmatpush.msra.mxu0 0.0
    %137 = vmatpush.msra.mxu0 0.0
    %138 = vmatpush.msra.mxu0 0.0
    %139 = vmatpush.msra.mxu0 0.0
    %140 = vmatpush.msra.mxu0 0.0
    %141 = vmatpush.msra.mxu0 0.0
    %142 = vmatpush.msra.mxu0 0.0
    %143 = vmatpush.msra.mxu0 0.0
    %144 = vmatpush.msra.mxu0 0.0
    %145 = vmatpush.msra.mxu0 0.0
    %146 = vmatpush.msra.mxu0 0.0
    %147 = vmatpush.msra.mxu0 0.0
    %148 = vmatpush.msra.mxu0 %v125
    %149 = vmatpush.msra.mxu0 %v124
    %150 = vmatmul.f32.gmra.mxu0 %v132
    %v151 = vpop.f32.mrf.mxu0
    %v152 = vadd.f32 %v128, %v151
    %153 = vdwg.mxu0
    %v154 = vmax.f32 %v152, 0.0
    %v155 = vld [vmem:[#allocation7] sm:$0xff]
    %v156 = vld [vmem:[#allocation7 + $0x8] sm:$0xff]
    %v157 = vld [vmem:[#allocation7 + $0x10] sm:$0xff]
    %v158 = vld [vmem:[#allocation7 + $0x18] sm:$0xff]
    %v159 = vld [vmem:[#allocation7 + $0x20] sm:$0xff]
    %v160 = vld [vmem:[#allocation7 + $0x28] sm:$0xff]
    %v161 = vld [vmem:[#allocation7 + $0x30] sm:$0xff]
    %v162 = vld [vmem:[#allocation7 + $0x38] sm:$0xff]
    %v163 = vld [vmem:[#allocation8] sm:$0x1]
    %v165 = vperm.slane %v163, 0
    %vm167 = vcmask 523264
    %v169 = vsel %vm167, %v154, 0
    %171 = vmatpush.msra.mxu0 0.0
    %172 = vmatpush.msra.mxu0 0.0
    %173 = vmatpush.msra.mxu0 0.0
    %174 = vmatpush.msra.mxu0 0.0
    %175 = vmatpush.msra.mxu0 0.0
    %176 = vmatpush.msra.mxu0 0.0
    %177 = vmatpush.msra.mxu0 0.0
    %178 = vmatpush.msra.mxu0 0.0
    %179 = vmatpush.msra.mxu0 %v162
    %180 = vmatpush.msra.mxu0 %v161
    %181 = vmatpush.msra.mxu0 %v160
    %182 = vmatpush.msra.mxu0 %v159
    %183 = vmatpush.msra.mxu0 %v158
    %184 = vmatpush.msra.mxu0 %v157
    %185 = vmatpush.msra.mxu0 %v156
    %186 = vmatpush.msra.mxu0 %v155
    %187 = vmatmul.f32.gmra.mxu0 %v169
    %v188 = vpop.f32.mrf.mxu0
    %v189 = vadd.f32 %v165, %v188
    %190 = vdwg.mxu0
    %v191 = vmax.f32 %v189, 0.0
    %v192 = vld [vmem:[#allocation10] sm:$0xff]
    %v193 = vld [vmem:[#allocation10 + $0x8] sm:$0xff]
    %v194 = vld [vmem:[#allocation10 + $0x10] sm:$0xff]
    %v195 = vld [vmem:[#allocation10 + $0x18] sm:$0xff]
    %v196 = vld [vmem:[#allocation10 + $0x20] sm:$0xff]
    %v197 = vld [vmem:[#allocation10 + $0x28] sm:$0xff]
    %v198 = vld [vmem:[#allocation10 + $0x30] sm:$0xff]
    %v199 = vld [vmem:[#allocation10 + $0x38] sm:$0xff]
    %v200 = vld [vmem:[#allocation10 + $0x40] sm:$0xff]
    %v201 = vld [vmem:[#allocation10 + $0x48] sm:$0xff]
    %v202 = vld [vmem:[#allocation10 + $0x50] sm:$0xff]
    %v203 = vld [vmem:[#allocation10 + $0x58] sm:$0xff]
    %v204 = vld [vmem:[#allocation10 + $0x60] sm:$0xff]
    %v205 = vld [vmem:[#allocation10 + $0x68] sm:$0xff]
    %v206 = vld [vmem:[#allocation10 + $0x70] sm:$0xff]
    %v207 = vld [vmem:[#allocation10 + $0x78] sm:$0xff]
    %v208 = vld [vmem:[#allocation10 + $0x80] sm:$0xff]
    %v209 = vld [vmem:[#allocation10 + $0x88] sm:$0xff]
    %v210 = vld [vmem:[#allocation10 + $0x90] sm:$0xff]
    %v211 = vld [vmem:[#allocation10 + $0x98] sm:$0xff]
    %v212 = vld [vmem:[#allocation10 + $0xa0] sm:$0xff]
    %v213 = vld [vmem:[#allocation10 + $0xa8] sm:$0xff]
    %v214 = vld [vmem:[#allocation10 + $0xb0] sm:$0xff]
    %v215 = vld [vmem:[#allocation10 + $0xb8] sm:$0xff]
    %v216 = vld [vmem:[#allocation10 + $0xc0] sm:$0xff]
    %v217 = vld [vmem:[#allocation10 + $0xc8] sm:$0xff]
    %v218 = vld [vmem:[#allocation10 + $0xd0] sm:$0xff]
    %v219 = vld [vmem:[#allocation10 + $0xd8] sm:$0xff]
    %v220 = vld [vmem:[#allocation10 + $0xe0] sm:$0xff]
    %v221 = vld [vmem:[#allocation10 + $0xe8] sm:$0xff]
    %v222 = vld [vmem:[#allocation10 + $0xf0] sm:$0xff]
    %v223 = vld [vmem:[#allocation10 + $0xf8] sm:$0xff]
    %v224 = vld [vmem:[%s6] sm:$0x3]
    %v226 = vperm.slane %v224, 0
    %v227 = vperm.slane %v224, 1
    %230 = vmatpush.msra.mxu0 %v222
    %231 = vmatpush.msra.mxu0 %v220
    %232 = vmatpush.msra.mxu0 %v218
    %233 = vmatpush.msra.mxu0 %v216
    %234 = vmatpush.msra.mxu0 %v214
    %235 = vmatpush.msra.mxu0 %v212
    %236 = vmatpush.msra.mxu0 %v210
    %237 = vmatpush.msra.mxu0 %v208
    %238 = vmatpush.msra.mxu0 %v206
    %239 = vmatpush.msra.mxu0 %v204
    %240 = vmatpush.msra.mxu0 %v202
    %241 = vmatpush.msra.mxu0 %v200
    %242 = vmatpush.msra.mxu0 %v198
    %243 = vmatpush.msra.mxu0 %v196
    %244 = vmatpush.msra.mxu0 %v194
    %245 = vmatpush.msra.mxu0 %v192
    %246 = vmatmul.f32.gmra.mxu0 %v191
    %v247 = vpop.f32.mrf.mxu0
    %v248 = vadd.f32 %v226, %v247
    %249 = vdwg.mxu0
    %250 = vmatpush.msra.mxu0 %v223
    %251 = vmatpush.msra.mxu0 %v221
    %252 = vmatpush.msra.mxu0 %v219
    %253 = vmatpush.msra.mxu0 %v217
    %254 = vmatpush.msra.mxu0 %v215
    %255 = vmatpush.msra.mxu0 %v213
    %256 = vmatpush.msra.mxu0 %v211
    %257 = vmatpush.msra.mxu0 %v209
    %258 = vmatpush.msra.mxu0 %v207
    %259 = vmatpush.msra.mxu0 %v205
    %260 = vmatpush.msra.mxu0 %v203
    %261 = vmatpush.msra.mxu0 %v201
    %262 = vmatpush.msra.mxu0 %v199
    %263 = vmatpush.msra.mxu0 %v197
    %264 = vmatpush.msra.mxu0 %v195
    %265 = vmatpush.msra.mxu0 %v193
    %266 = vmatmul.f32.gmra.mxu0 %v191
    %v267 = vpop.f32.mrf.mxu0
    %v268 = vadd.f32 %v227, %v267
    %269 = vdwg.mxu0
    %v270 = vmax.f32 %v248, 0.0
    %v271 = vmax.f32 %v268, 0.0
    %v272 = vld [vmem:[#allocation11] sm:$0xff]
    %v273 = vld [vmem:[#allocation11 + $0x8] sm:$0xff]
    %v274 = vld [vmem:[#allocation11 + $0x10] sm:$0xff]
    %v275 = vld [vmem:[#allocation11 + $0x18] sm:$0xff]
    %v276 = vld [vmem:[#allocation11 + $0x20] sm:$0xff]
    %v277 = vld [vmem:[#allocation11 + $0x28] sm:$0xff]
    %v278 = vld [vmem:[#allocation11 + $0x30] sm:$0xff]
    %v279 = vld [vmem:[#allocation11 + $0x38] sm:$0xff]
    %v280 = vld [vmem:[#allocation11 + $0x40] sm:$0xff]
    %v281 = vld [vmem:[#allocation11 + $0x48] sm:$0xff]
    %v282 = vld [vmem:[#allocation11 + $0x50] sm:$0xff]
    %v283 = vld [vmem:[#allocation11 + $0x58] sm:$0xff]
    %v284 = vld [vmem:[#allocation11 + $0x60] sm:$0xff]
    %v285 = vld [vmem:[#allocation11 + $0x68] sm:$0xff]
    %v286 = vld [vmem:[#allocation11 + $0x70] sm:$0xff]
    %v287 = vld [vmem:[#allocation11 + $0x78] sm:$0xff]
    %v288 = vld [vmem:[#allocation11 + $0x80] sm:$0xff]
    %v289 = vld [vmem:[#allocation11 + $0x88] sm:$0xff]
    %v290 = vld [vmem:[#allocation11 + $0x90] sm:$0xff]
    %v291 = vld [vmem:[#allocation11 + $0x98] sm:$0xff]
    %v292 = vld [vmem:[#allocation11 + $0xa0] sm:$0xff]
    %v293 = vld [vmem:[#allocation11 + $0xa8] sm:$0xff]
    %v294 = vld [vmem:[#allocation11 + $0xb0] sm:$0xff]
    %v295 = vld [vmem:[#allocation11 + $0xb8] sm:$0xff]
    %v296 = vld [vmem:[#allocation11 + $0xc0] sm:$0xff]
    %v297 = vld [vmem:[#allocation11 + $0xc8] sm:$0xff]
    %v298 = vld [vmem:[#allocation11 + $0xd0] sm:$0xff]
    %v299 = vld [vmem:[#allocation11 + $0xd8] sm:$0xff]
    %v300 = vld [vmem:[#allocation11 + $0xe0] sm:$0xff]
    %v301 = vld [vmem:[#allocation11 + $0xe8] sm:$0xff]
    %v302 = vld [vmem:[#allocation11 + $0xf0] sm:$0xff]
    %v303 = vld [vmem:[#allocation11 + $0xf8] sm:$0xff]
    %v304 = vld [vmem:[%s8] sm:$0x1]
    %v306 = vperm.slane %v304, 0
    %308 = vmatpush.msra.mxu0 %v287
    %309 = vmatpush.msra.mxu0 %v286
    %310 = vmatpush.msra.mxu0 %v285
    %311 = vmatpush.msra.mxu0 %v284
    %312 = vmatpush.msra.mxu0 %v283
    %313 = vmatpush.msra.mxu0 %v282
    %314 = vmatpush.msra.mxu0 %v281
    %315 = vmatpush.msra.mxu0 %v280
    %316 = vmatpush.msra.mxu0 %v279
    %317 = vmatpush.msra.mxu0 %v278
    %318 = vmatpush.msra.mxu0 %v277
    %319 = vmatpush.msra.mxu0 %v276
    %320 = vmatpush.msra.mxu0 %v275
    %321 = vmatpush.msra.mxu0 %v274
    %322 = vmatpush.msra.mxu0 %v273
    %323 = vmatpush.msra.mxu0 %v272
    %324 = vmatmul.f32.gmra.mxu0 %v270
    %v325 = vpop.f32.mrf.mxu0
    %v326 = vadd.f32 %v306, %v325
    %327 = vdwg.mxu0
    %328 = vmatpush.msra.mxu0 %v303
    %329 = vmatpush.msra.mxu0 %v302
    %330 = vmatpush.msra.mxu0 %v301
    %331 = vmatpush.msra.mxu0 %v300
    %332 = vmatpush.msra.mxu0 %v299
    %333 = vmatpush.msra.mxu0 %v298
    %334 = vmatpush.msra.mxu0 %v297
    %335 = vmatpush.msra.mxu0 %v296
    %336 = vmatpush.msra.mxu0 %v295
    %337 = vmatpush.msra.mxu0 %v294
    %338 = vmatpush.msra.mxu0 %v293
    %339 = vmatpush.msra.mxu0 %v292
    %340 = vmatpush.msra.mxu0 %v291
    %341 = vmatpush.msra.mxu0 %v290
    %342 = vmatpush.msra.mxu0 %v289
    %343 = vmatpush.msra.mxu0 %v288
    %344 = vmatmul.f32.gmra.mxu0 %v271
    %v345 = vpop.f32.mrf.mxu0
    %v346 = vadd.f32 %v326, %v345
    %347 = vdwg.mxu0
    %348 = vst [vmem:[#allocation13] sm:$0xff] %v346
    // Predicated region
    $region62: #{tpu_custom_call.1} parent=1 // pred_check
      _
    $region63: #{tpu_custom_call.1} parent=1 // pred_check_branch
      %350 = sbr.rel (0) target = $region65
    $region64: #{tpu_custom_call.1} parent=1 // pred_region
      %352 = vsyncadd [#allocation4], 0
      %s354 = sshll.u32 [#allocation13], 4
      %s355 = int_to_ptr.vmem [resolvable:$true] %s354
      %s356 = sshll.u32 %s9, 4
      %s357 = int_to_ptr.hbm [resolvable:$true] %s356
      %359 = dma.vmem_to_hbm [thread:$0]  %s355, 128, %s357, [#allocation4]
    $region65: #{tpu_custom_call.1} parent=1 // pred_fallthru
      _
    // Predicated region
    $region66: #{tpu_custom_call.1} parent=1 // pred_check
      _
    $region67: #{tpu_custom_call.1} parent=1 // pred_check_branch
      %361 = sbr.rel (0) target = $region69
    $region68: #{tpu_custom_call.1} parent=1 // pred_region
      %363 = dma.done [#allocation4], 128
    $region69: #{tpu_custom_call.1} parent=1 // pred_fallthru
      _
    %364 = vsyncpa [#allocation3], 1
    %365 = vsyncpa [#allocation6], 1
    %366 = vsyncpa [#allocation9], 1
    %367 = vsyncpa [#allocation12], 1
    %368 = vsyncpa [#allocation4], 1

</llo_original>
